<compile_context>
chip_gen: v5e
topology: v5e:2x2
jax: 0.10.0
libtpu: 0.0.40
codegen_flags: <defaults>
</compile_context>

<pallas_src>
import functools

import jax
import jax.numpy as jnp
from jax.experimental import pallas as pl
from jax.experimental.pallas import tpu as pltpu


def _positive_diag_kernel(d_ref, o_ref, *, eps: float):
    """One (T, T) output tile of diag(d**2 + eps).

    d_ref: (1, T) float32  -- column slice of the parameter vector
    o_ref: (T, T) float32  -- output tile (i, j) of the dense diagonal matrix
    """
    i = pl.program_id(0)
    j = pl.program_id(1)

    # Off-diagonal tiles: pure zero store (store-slot / HBM-write bound only).
    @pl.when(i != j)
    def _():
        o_ref[...] = jnp.zeros_like(o_ref)

    # Diagonal tiles (valid because TM == TN and i == j): local row==col mask.
    @pl.when(i == j)
    def _():
        t = o_ref.shape[0]
        d = d_ref[...]                          # (1, T)
        val = d * d + jnp.float32(eps)          # (1, T), elementwise on VPU
        row = jax.lax.broadcasted_iota(jnp.int32, (t, t), 0)
        col = jax.lax.broadcasted_iota(jnp.int32, (t, t), 1)
        # Scalar 0.0 lowers to a splat; (1, T) val broadcasts over rows.
        o_ref[...] = jnp.where(row == col, val, 0.0)


def _round_up(x: int, m: int) -> int:
    return (x + m - 1) // m * m


def positive_diagonal(d: jax.Array, eps: float = 1e-16, *, tile: int = 512) -> jax.Array:
    """JAX/Pallas equivalent of PositiveDiagonal.forward().

    Args:
      d: (n_dims,) parameter vector.
      eps: small positive constant added to the squared diagonal.
      tile: square output tile edge (rounded to a multiple of 128).

    Returns:
      (n_dims, n_dims) float32 matrix = diag(d**2 + eps).
    """
    n = d.shape[0]
    d = d.astype(jnp.float32)

    # Tiny matrices: launch / grid-step overhead dominates -> plain XLA.
    if n < 128:
        return jnp.diag(d * d + jnp.float32(eps))

    # Lane-dense square tile: multiple of 128 (also satisfies the 8-sublane rule).
    t = min(_round_up(tile, 128), _round_up(n, 128))
    n_pad = _round_up(n, t)
    d_pad = jnp.pad(d, (0, n_pad - n)) if n_pad != n else d
    d2 = d_pad.reshape(1, n_pad)               # (1, N_pad) row vector, lanes = N_pad

    kernel = functools.partial(_positive_diag_kernel, eps=eps)
    out = pl.pallas_call(
        kernel,
        out_shape=jax.ShapeDtypeStruct((n_pad, n_pad), jnp.float32),
        grid=(n_pad // t, n_pad // t),
        in_specs=[pl.BlockSpec((1, t), lambda i, j: (0, j))],
        out_specs=pl.BlockSpec((t, t), lambda i, j: (i, j)),
        compiler_params=pltpu.CompilerParams(
            dimension_semantics=("parallel", "parallel")),
        cost_estimate=pl.CostEstimate(
            flops=2 * n,                       # square + add on the diagonal only
            transcendentals=0,
            bytes_accessed=4 * n_pad * n_pad + 4 * n_pad),
    )(d2)

    if n_pad != n:
        out = out[:n, :n]                      # drop padded rows/cols (their eps too)
    return out


if __name__ == "__main__":
    eps = 1e-16
    key = jax.random.PRNGKey(0)

    # --- Pallas path: n_dims large enough to tile (grid 3x3 with tile=128) ---
    n_dims = 384
    D = jax.random.normal(key, (n_dims,), dtype=jnp.float32)

    out = positive_diagonal(D, eps=eps, tile=128)
    out = jax.block_until_ready(out)

    ref = jnp.diag(D * D + jnp.float32(eps))
    assert out.shape == (n_dims, n_dims)
    assert out.dtype == jnp.float32
    assert jnp.allclose(out, ref, atol=1e-6), "mismatch vs reference (pallas path)"

    # --- Tiny-N fallback path (matches original module demo size) ---
    n_small = 32
    D_small = jax.random.normal(jax.random.PRNGKey(1), (n_small,), dtype=jnp.float32)
    out_small = jax.block_until_ready(positive_diagonal(D_small, eps=eps))
    ref_small = jnp.diag(D_small * D_small + jnp.float32(eps))
    assert jnp.allclose(out_small, ref_small, atol=1e-6), "mismatch vs reference (small path)"

    print("KERNEL_OK")
</pallas_src>

<mosaic_0001>
module attributes {stable_mosaic.version = 11 : i64} {
  func.func @_positive_diag_kernel(%arg0: i32, %arg1: i32, %arg2: memref<1x128xf32, #tpu.memory_space<vmem>>, %arg3: memref<128x128xf32, #tpu.memory_space<vmem>>) attributes {dimension_semantics = [#tpu.dimension_semantics<parallel>, #tpu.dimension_semantics<parallel>], iteration_bounds = array<i64: 3, 3>, scalar_prefetch = 0 : i64, scratch_operands = 0 : i64, tpu.core_type = #tpu.core_type<tc>, window_params = [{transform_indices = @transform_0, window_bounds = array<i64: 1, 128>}, {transform_indices = @transform_1, window_bounds = array<i64: 128, 128>}]} {
    %0 = arith.cmpi ne, %arg0, %arg1 : i32
    %1 = arith.extui %0 : i1 to i32
    %c0_i32 = arith.constant 0 : i32
    %2 = arith.cmpi ne, %1, %c0_i32 : i32
    scf.if %2 {
      %cst = arith.constant 0.000000e+00 : f32
      %6 = vector.broadcast %cst : f32 to vector<128x128xf32>
      %c0 = arith.constant 0 : index
      %c0_1 = arith.constant 0 : index
      %7 = vector.load %arg3[%c0, %c0_1] : memref<128x128xf32, #tpu.memory_space<vmem>>, vector<128x128xf32>
      tpu.vector_store %arg3[%c0, %c0_1], %6 {strides = array<i32>} : memref<128x128xf32, #tpu.memory_space<vmem>>, vector<128x128xf32>,
    } else {
    }
    %3 = arith.cmpi eq, %arg0, %arg1 : i32
    %4 = arith.extui %3 : i1 to i32
    %c0_i32_0 = arith.constant 0 : i32
    %5 = arith.cmpi ne, %4, %c0_i32_0 : i32
    scf.if %5 {
      %c0 = arith.constant 0 : index
      %c0_1 = arith.constant 0 : index
      %6 = vector.load %arg2[%c0, %c0_1] : memref<1x128xf32, #tpu.memory_space<vmem>>, vector<1x128xf32>
      %7 = arith.mulf %6, %6 : vector<1x128xf32>
      %cst = arith.constant 1.000000e-16 : f32
      %8 = vector.broadcast %cst : f32 to vector<1x128xf32>
      %9 = arith.addf %7, %8 : vector<1x128xf32>
      %10 = tpu.iota {dimensions = array<i32: 0>} : vector<128x128xi32>
      %11 = tpu.iota {dimensions = array<i32: 1>} : vector<128x128xi32>
      %12 = arith.cmpi eq, %10, %11 : vector<128x128xi32>
      %cst_2 = arith.constant 0.000000e+00 : f32
      %13 = vector.shape_cast %9 : vector<1x128xf32> to vector<1x128xf32>
      %14 = vector.broadcast %13 : vector<1x128xf32> to vector<128x128xf32>
      %15 = vector.broadcast %cst_2 : f32 to vector<128x128xf32>
      %16 = arith.select %12, %14, %15 : vector<128x128xi1>, vector<128x128xf32>
      %c0_3 = arith.constant 0 : index
      %c0_4 = arith.constant 0 : index
      %17 = vector.load %arg3[%c0_3, %c0_4] : memref<128x128xf32, #tpu.memory_space<vmem>>, vector<128x128xf32>
      tpu.vector_store %arg3[%c0_3, %c0_4], %16 {strides = array<i32>} : memref<128x128xf32, #tpu.memory_space<vmem>>, vector<128x128xf32>,
    } else {
    }
    return
  }
  func.func @transform_0(%arg0: i32, %arg1: i32) -> (i32, i32) {
    %c0_i32 = arith.constant 0 : i32
    %c0_i32_0 = arith.constant 0 : i32
    return %c0_i32, %arg1 : i32, i32
  }
  func.func @transform_1(%arg0: i32, %arg1: i32) -> (i32, i32) {
    %c0_i32 = arith.constant 0 : i32
    return %arg0, %arg1 : i32, i32
  }
}

</mosaic_0001>

<llo_original>
// kernel: tpu_custom_call.1
$region0: #{tpu_custom_call.1}
  #allocation0 [shape = 'u32[]', space=smem, size = 0x4, offset = 0x4, fixed_abs, tag = 'smem constant byte address 0x4 - core index']
  #allocation1 [shape = 'u32[72,128]{1,0:T(1,128)}', space=vmem, size = 0x9000, scoped, tag = 'internal scratch']
  %s0 = inlined_call_operand.hbm [shape: f32[1,384], index: 0, kind: input, shape index: {}]
  %s1 = inlined_call_operand.hbm [shape: f32[384,384], index: 1, kind: output, shape index: {}]
  %s2 = sld [smem:[#allocation0]]
  $region49: #{tpu_custom_call.1} parent=0
    _
  %s4 = ssub.s32 1, %s2
  %s5 = scalar_select 0, %s4, %s2
  $region1: #{tpu_custom_call.1} parent=0
    #allocation2 [shape = 'u8[1024]{0}', space=vmem, size = 0x400, scoped, tag = 'input window, operand 0']
    #allocation3 [shape = 's32[2]{0}', space=sflag, size = 0x8, scoped, tag = 'scoped memory for tpu_custom_call.1']
    #allocation4 [shape = 's32[2]{0}', space=sflag, size = 0x8, scoped, tag = 'scoped memory for tpu_custom_call.1']
    #allocation5 [shape = 'u8[131072]{0}', space=vmem, size = 0x20000, scoped, tag = 'output window, operand 0']
    %6 = vsyncpa [#allocation3], 0
    %s7 = scalar_lea.sflag [#allocation3], 1
    %8 = vsyncpa %s7, 0
    %9 = vsyncpa [#allocation4], 0
    %s10 = scalar_lea.sflag [#allocation4], 1
    %11 = vsyncpa %s10, 0
    loop: start=0, step=1, limit=11
    $region2: #{tpu_custom_call.1} parent=1 // loop_pre_header
      _
    $region3: #{tpu_custom_call.1} parent=1 // loop_header
      %s13 = sphi 0, %s17
      %p14 = scmp.ge.s32.totalorder %s13, 11
      %s20 = sphi 0, %s32
      %s21 = sphi 0, %s28
      %s22 = sphi 0, %s20
      %s23 = sphi 0, %s21
      %s24 = sphi 0, %s22
      %s25 = sphi 0, %s23
      %s35 = sphi 0, %s37
      %s38 = sphi 0, %s35
      %s39 = sphi 0, %s38
      %s55 = sphi 0, %s39
      %s63 = sphi 0, %s65
      %s66 = sphi 0, %s63
      %s67 = sphi 0, %s66
      %s83 = sphi 0, %s67
    $region4: #{tpu_custom_call.1} parent=1 // loop_header_branch
      %16 = sbr.rel (%p14) target = $region8
    $region5: #{tpu_custom_call.1} parent=1 // loop_body
      %s18 = ssub.s32 %s13, 1
      %s19 = ssub.s32 %s13, 2
      %s26 = sadd.s32 1, %s21
      %p27 = scmp.ge.s32.totalorder %s26, 3
      %s28 = scalar_select %p27, 0, %s26
      %s29 = sadd.s32 1, %s20
      %s30 = scalar_select %p27, %s29, %s20
      %p31 = scmp.ge.s32.totalorder %s30, 3
      %s32 = scalar_select %p31, 0, %s30
      %s33 = ssub.s32 %s21, %s28
      %p34 = scmp.eq.s32.totalorder %s33, 0
      %s36 = sadd.s32 %s35, 1
      %s37 = scalar_select %p34, %s35, %s36
      %p40 = pneg %p34
      %p41 = scmp.eq.s32.totalorder %s13, 8
      %p42 = por %p40, %p41
      %p43 = scmp.ne.s32.totalorder %s35, %s38
      %p44 = scmp.eq.s32.totalorder %s13, 0
      %p45 = por %p43, %p44
      %p46 = scmp.ne.s32.totalorder %s35, %s38
      %p47 = scmp.eq.s32.totalorder %s18, 8
      %p48 = por %p46, %p47
      %p49 = scmp.ne.s32.totalorder %s38, %s39
      %p50 = scmp.eq.s32.totalorder %s18, 0
      %p51 = por %p49, %p50
      %p52 = scmp.ne.s32.totalorder %s38, %s39
      %p53 = scmp.eq.s32.totalorder %s19, 8
      %p54 = por %p52, %p53
      %p56 = scmp.ne.s32.totalorder %s39, %s55
      %p57 = scmp.eq.s32.totalorder %s19, 0
      %p58 = por %p56, %p57
      %s59 = ssub.s32 %s20, %s32
      %s60 = ssub.s32 %s21, %s28
      %s61 = sor.u32 %s59, %s60
      %p62 = scmp.eq.s32.totalorder %s61, 0
      %s64 = sadd.s32 %s63, 1
      %s65 = scalar_select %p62, %s63, %s64
      %p68 = pneg %p62
      %p69 = scmp.eq.s32.totalorder %s13, 8
      %p70 = por %p68, %p69
      %p71 = scmp.ne.s32.totalorder %s63, %s66
      %p72 = scmp.eq.s32.totalorder %s13, 0
      %p73 = por %p71, %p72
      %p74 = scmp.ne.s32.totalorder %s63, %s66
      %p75 = scmp.eq.s32.totalorder %s18, 8
      %p76 = por %p74, %p75
      %p77 = scmp.ne.s32.totalorder %s66, %s67
      %p78 = scmp.eq.s32.totalorder %s18, 0
      %p79 = por %p77, %p78
      %p80 = scmp.ne.s32.totalorder %s66, %s67
      %p81 = scmp.eq.s32.totalorder %s19, 8
      %p82 = por %p80, %p81
      %p84 = scmp.ne.s32.totalorder %s67, %s83
      %p85 = scmp.eq.s32.totalorder %s19, 0
      %p86 = por %p84, %p85
      %p87 = scmp.le.s32.totalorder 1, %s13
      %p88 = scmp.lt.s32.totalorder %s13, 10
      %p89 = pnand %p87, %p88
      %p90 = pneg %p89
      // Predicated region
      $region9: #{tpu_custom_call.1} parent=5 // pred_check
        _
      $region10: #{tpu_custom_call.1} parent=5 // pred_check_branch
        %92 = sbr.rel (%p89) target = $region12
      $region11: #{tpu_custom_call.1} parent=5 // pred_region
        %s93 = ssub.s32 %s13, 1
      $region12: #{tpu_custom_call.1} parent=5 // pred_fallthru
        _
      %p94 = scmp.lt.s32.totalorder %s13, 9
      // Predicated region
      $region13: #{tpu_custom_call.1} parent=5 // pred_check
        %p95 = pneg %p94
      $region14: #{tpu_custom_call.1} parent=5 // pred_check_branch
        %97 = sbr.rel (%p95) target = $region16
      $region15: #{tpu_custom_call.1} parent=5 // pred_region
        // Predicated region
        $region17: #{tpu_custom_call.1} parent=15 // pred_check
          %p98 = pneg %p45
        $region18: #{tpu_custom_call.1} parent=15 // pred_check_branch
          %100 = sbr.rel (%p98) target = $region20
        $region19: #{tpu_custom_call.1} parent=15 // pred_region
          %s101 = sand.u32 %s35, 1
          %s102 = scalar_lea.sflag [#allocation3], %s101
          %s103 = sand.u32 %s35, 1
          %s104 = scalar_lea.vmem [#allocation2], %s103
          %106 = vsyncadd %s102, 0
          %s107 = scalar_lea.hbm %s0, %s21
          %s109 = sshll.u32 %s107, 4
          %s110 = int_to_ptr.hbm [resolvable:$true] %s109
          %s111 = sshll.u32 %s104, 4
          %s112 = int_to_ptr.vmem [resolvable:$true] %s111
          %114 = dma.hbm_to_vmem [thread:$0]  %s110, 16, %s112, %s102
        $region20: #{tpu_custom_call.1} parent=15 // pred_fallthru
          _
      $region16: #{tpu_custom_call.1} parent=5 // pred_fallthru
        _
      %p115 = scmp.le.s32.totalorder 1, %s13
      %p116 = scmp.lt.s32.totalorder %s13, 10
      %p117 = pnand %p115, %p116
      %p118 = pneg %p117
      // Predicated region
      $region21: #{tpu_custom_call.1} parent=5 // pred_check
        _
      $region22: #{tpu_custom_call.1} parent=5 // pred_check_branch
        %120 = sbr.rel (%p117) target = $region24
      $region23: #{tpu_custom_call.1} parent=5 // pred_region
        %s121 = ssub.s32 %s13, 1
        %s122 = sand.u32 %s38, 1
        %s123 = scalar_lea.sflag [#allocation3], %s122
        %s124 = sand.u32 %s38, 1
        %s125 = scalar_lea.vmem [#allocation2], %s124
        // Predicated region
        $region25: #{tpu_custom_call.1} parent=23 // pred_check
          %p126 = pneg %p51
        $region26: #{tpu_custom_call.1} parent=23 // pred_check_branch
          %128 = sbr.rel (%p126) target = $region28
        $region27: #{tpu_custom_call.1} parent=23 // pred_region
          %130 = dma.done %s123, 16
        $region28: #{tpu_custom_call.1} parent=23 // pred_fallthru
          _
        %s131 = sand.u32 %s38, 1
        %s132 = scalar_lea.sflag [#allocation3], %s131
        %s133 = sand.u32 %s38, 1
        %s134 = scalar_lea.vmem [#allocation2], %s133
        %p135 = pneg %p51
        %p136 = pneg %p48
        %p137 = pneg %p79
        %p138 = pneg %p76
        %s139 = sand.u32 %s66, 1
        %s140 = scalar_lea.sflag [#allocation4], %s139
        %s141 = sand.u32 %s66, 1
        %s142 = smul.addr %s141, 128
        %s143 = scalar_lea.vmem [#allocation5], %s142
        %s144 = smul.u32 16, %s22
        %p145 = scmp.ne.s32.totalorder %s22, %s23
        // Predicated region
        $region29: #{tpu_custom_call.1} parent=23 // pred_check
          %p146 = pneg %p145
        $region30: #{tpu_custom_call.1} parent=23 // pred_check_branch
          %148 = sbr.rel (%p146) target = $region32
        $region31: #{tpu_custom_call.1} parent=23 // pred_region
          %149 = vst [vmem:[%s143] sm:$0xff] 0.0
          %150 = vst [vmem:[%s143 + $0x8] sm:$0xff] 0.0
          %151 = vst [vmem:[%s143 + $0x10] sm:$0xff] 0.0
          %152 = vst [vmem:[%s143 + $0x18] sm:$0xff] 0.0
          %153 = vst [vmem:[%s143 + $0x20] sm:$0xff] 0.0
          %154 = vst [vmem:[%s143 + $0x28] sm:$0xff] 0.0
          %155 = vst [vmem:[%s143 + $0x30] sm:$0xff] 0.0
          %156 = vst [vmem:[%s143 + $0x38] sm:$0xff] 0.0
          %157 = vst [vmem:[%s143 + $0x40] sm:$0xff] 0.0
          %158 = vst [vmem:[%s143 + $0x48] sm:$0xff] 0.0
          %159 = vst [vmem:[%s143 + $0x50] sm:$0xff] 0.0
          %160 = vst [vmem:[%s143 + $0x58] sm:$0xff] 0.0
          %161 = vst [vmem:[%s143 + $0x60] sm:$0xff] 0.0
          %162 = vst [vmem:[%s143 + $0x68] sm:$0xff] 0.0
          %163 = vst [vmem:[%s143 + $0x70] sm:$0xff] 0.0
          %164 = vst [vmem:[%s143 + $0x78] sm:$0xff] 0.0
        $region32: #{tpu_custom_call.1} parent=23 // pred_fallthru
          _
        %p165 = scmp.eq.s32.totalorder %s22, %s23
        // Predicated region
        $region33: #{tpu_custom_call.1} parent=23 // pred_check
          %p166 = pneg %p165
        $region34: #{tpu_custom_call.1} parent=23 // pred_check_branch
          %168 = sbr.rel (%p166) target = $region36
        $region35: #{tpu_custom_call.1} parent=23 // pred_region
          %v169 = vld [vmem:[%s125] sm:$0x1]
          %v170 = vmul.f32 %v169, %v169
          %v171 = vadd.f32 %v170, 1e-16
          %v172 = vlaneseq
          %v173 = vshrl.u32 %v172, 7
          %v174 = vadd.s32 %v173, 8
          %v175 = vadd.s32 %v173, 16
          %v176 = vadd.s32 %v173, 24
          %v177 = vadd.s32 %v173, 32
          %v178 = vadd.s32 %v173, 40
          %v179 = vadd.s32 %v173, 48
          %v180 = vadd.s32 %v173, 56
          %v181 = vadd.s32 %v173, 64
          %v182 = vadd.s32 %v173, 72
          %v183 = vadd.s32 %v173, 80
          %v184 = vadd.s32 %v173, 88
          %v185 = vadd.s32 %v173, 96
          %v186 = vadd.s32 %v173, 104
          %v187 = vadd.s32 %v173, 112
          %v188 = vadd.s32 %v173, 120
          %v189 = vlaneseq
          %v190 = vand.u32 %v189, 127
          %vm191 = vcmp.eq.s32.totalorder %v173, %v190
          %vm192 = vcmp.eq.s32.totalorder %v174, %v190
          %vm193 = vcmp.eq.s32.totalorder %v175, %v190
          %vm194 = vcmp.eq.s32.totalorder %v176, %v190
          %vm195 = vcmp.eq.s32.totalorder %v177, %v190
          %vm196 = vcmp.eq.s32.totalorder %v178, %v190
          %vm197 = vcmp.eq.s32.totalorder %v179, %v190
          %vm198 = vcmp.eq.s32.totalorder %v180, %v190
          %vm199 = vcmp.eq.s32.totalorder %v181, %v190
          %vm200 = vcmp.eq.s32.totalorder %v182, %v190
          %vm201 = vcmp.eq.s32.totalorder %v183, %v190
          %vm202 = vcmp.eq.s32.totalorder %v184, %v190
          %vm203 = vcmp.eq.s32.totalorder %v185, %v190
          %vm204 = vcmp.eq.s32.totalorder %v186, %v190
          %vm205 = vcmp.eq.s32.totalorder %v187, %v190
          %vm206 = vcmp.eq.s32.totalorder %v188, %v190
          %v208 = vperm.slane %v171, 0
          %v210 = vsel %vm191, %v208, 0.0
          %v211 = vsel %vm192, %v208, 0.0
          %v212 = vsel %vm193, %v208, 0.0
          %v213 = vsel %vm194, %v208, 0.0
          %v214 = vsel %vm195, %v208, 0.0
          %v215 = vsel %vm196, %v208, 0.0
          %v216 = vsel %vm197, %v208, 0.0
          %v217 = vsel %vm198, %v208, 0.0
          %v218 = vsel %vm199, %v208, 0.0
          %v219 = vsel %vm200, %v208, 0.0
          %v220 = vsel %vm201, %v208, 0.0
          %v221 = vsel %vm202, %v208, 0.0
          %v222 = vsel %vm203, %v208, 0.0
          %v223 = vsel %vm204, %v208, 0.0
          %v224 = vsel %vm205, %v208, 0.0
          %v225 = vsel %vm206, %v208, 0.0
          %226 = vst [vmem:[%s143] sm:$0xff] %v210
          %227 = vst [vmem:[%s143 + $0x8] sm:$0xff] %v211
          %228 = vst [vmem:[%s143 + $0x10] sm:$0xff] %v212
          %229 = vst [vmem:[%s143 + $0x18] sm:$0xff] %v213
          %230 = vst [vmem:[%s143 + $0x20] sm:$0xff] %v214
          %231 = vst [vmem:[%s143 + $0x28] sm:$0xff] %v215
          %232 = vst [vmem:[%s143 + $0x30] sm:$0xff] %v216
          %233 = vst [vmem:[%s143 + $0x38] sm:$0xff] %v217
          %234 = vst [vmem:[%s143 + $0x40] sm:$0xff] %v218
          %235 = vst [vmem:[%s143 + $0x48] sm:$0xff] %v219
          %236 = vst [vmem:[%s143 + $0x50] sm:$0xff] %v220
          %237 = vst [vmem:[%s143 + $0x58] sm:$0xff] %v221
          %238 = vst [vmem:[%s143 + $0x60] sm:$0xff] %v222
          %239 = vst [vmem:[%s143 + $0x68] sm:$0xff] %v223
          %240 = vst [vmem:[%s143 + $0x70] sm:$0xff] %v224
          %241 = vst [vmem:[%s143 + $0x78] sm:$0xff] %v225
        $region36: #{tpu_custom_call.1} parent=23 // pred_fallthru
          _
        %s242 = sand.u32 %s66, 1
        %s243 = scalar_lea.sflag [#allocation4], %s242
        %s244 = sand.u32 %s66, 1
        %s245 = smul.addr %s244, 128
        %s246 = scalar_lea.vmem [#allocation5], %s245
        // Predicated region
        $region37: #{tpu_custom_call.1} parent=23 // pred_check
          %p247 = pneg %p76
        $region38: #{tpu_custom_call.1} parent=23 // pred_check_branch
          %249 = sbr.rel (%p247) target = $region40
        $region39: #{tpu_custom_call.1} parent=23 // pred_region
          %s250 = smul.u32 16, %s22
          %252 = vsyncadd %s243, 0
          %s253 = smul.addr %s250, 3
          %s254 = sadd.s32 %s23, %s253
          %s255 = smul.addr %s254, 8
          %s256 = scalar_lea.hbm %s1, %s255
          %s257 = sshll.u32 %s246, 4
          %s258 = int_to_ptr.vmem [resolvable:$true] %s257
          %s259 = sshll.u32 %s256, 4
          %s260 = int_to_ptr.hbm [resolvable:$true] %s259
          %265 = dma.vmem_to_hbm [thread:$0]  %s258, 2048, %s260, %s243, 128, 384, 8
        $region40: #{tpu_custom_call.1} parent=23 // pred_fallthru
          _
      $region24: #{tpu_custom_call.1} parent=5 // pred_fallthru
        _
      %p266 = scmp.le.s32.totalorder 2, %s13
      // Predicated region
      $region41: #{tpu_custom_call.1} parent=5 // pred_check
        %p267 = pneg %p266
      $region42: #{tpu_custom_call.1} parent=5 // pred_check_branch
        %269 = sbr.rel (%p267) target = $region44
      $region43: #{tpu_custom_call.1} parent=5 // pred_region
        %s270 = ssub.s32 %s13, 2
        // Predicated region
        $region45: #{tpu_custom_call.1} parent=43 // pred_check
          %p271 = pneg %p82
        $region46: #{tpu_custom_call.1} parent=43 // pred_check_branch
          %273 = sbr.rel (%p271) target = $region48
        $region47: #{tpu_custom_call.1} parent=43 // pred_region
          %s274 = sand.u32 %s67, 1
          %s275 = scalar_lea.sflag [#allocation4], %s274
          %s276 = sand.u32 %s67, 1
          %s277 = smul.addr %s276, 128
          %s278 = scalar_lea.vmem [#allocation5], %s277
          %280 = dma.done %s275, 2048
        $region48: #{tpu_custom_call.1} parent=43 // pred_fallthru
          _
      $region44: #{tpu_custom_call.1} parent=5 // pred_fallthru
        _
    $region6: #{tpu_custom_call.1} parent=1 // loop_footer
      %s17 = sadd.s32 1, %s13
    $region7: #{tpu_custom_call.1} parent=1 // loop_footer_branch
      %12 = sbr.rel target = $region3
    $region8: #{tpu_custom_call.1} parent=1 // loop_exit
      _
    %281 = vsyncpa [#allocation3], 1
    %s282 = scalar_lea.sflag [#allocation3], 1
    %283 = vsyncpa %s282, 1
    %284 = vsyncpa [#allocation4], 1
    %s285 = scalar_lea.sflag [#allocation4], 1
    %286 = vsyncpa %s285, 1

</llo_original>
